<compile_context>
chip_gen: v5e
topology: v5e:2x2
jax: 0.10.0
libtpu: 0.0.40
codegen_flags: <defaults>
</compile_context>

<pallas_src>
import jax
import jax.numpy as jnp
from jax import lax
from jax.experimental import pallas as pl
from jax.experimental.pallas import tpu as pltpu


def _attn_head_kernel(x_ref, enc_ref, wq_ref, bq_ref, o_ref):
    # Per-head block shapes (leading head dim squeezed away by BlockSpec):
    #   x_ref:   [S, D]        enc_ref: [2, S, M]  (enc_output[i] pre-transposed)
    #   wq_ref:  [D, QK]       bq_ref:  [1, QK]    o_ref: [S, D]
    x = x_ref[...]                                                   # [S, D]
    enc_kt = enc_ref[0]                                              # [S, M] == enc0^T
    enc_vt = enc_ref[1]                                              # [S, M] == enc1^T

    # q = x @ Wq^T + b  -- the 1/sqrt(qk_size) scale is already folded into Wq, b.
    q = jnp.dot(x, wq_ref[...], preferred_element_type=jnp.float32) + bq_ref[...]  # [S, QK]

    # e = q @ k^T = q @ (enc0 @ x)^T = (q . x^T) @ enc0^T
    # A.B^T dot_general contracting the lane-dense feature dim (D = QK = 128),
    # no transpose materialized, no [M, D] k tensor formed.
    qx = lax.dot_general(q, x, (((1,), (1,)), ((), ())),
                         preferred_element_type=jnp.float32)         # [S, S]
    e = jnp.dot(qx, enc_kt, preferred_element_type=jnp.float32)      # [S, M]

    # softmax over dim=1 of the 2-D e matrix == the key axis M (last dim here).
    m = jnp.max(e, axis=-1, keepdims=True)
    p = jnp.exp(e - m)
    denom = jnp.sum(p, axis=-1, keepdims=True)
    e_soft = p * pl.reciprocal(denom, approx=False)                  # [S, M]

    # z = e_soft @ v^T = e_soft @ (enc1 @ x)^T = (e_soft . x^T) @ enc1^T
    # (contraction of e_soft's key axis with x's feature axis matches the module's
    #  e @ v^T semantics; it requires M == x_size, asserted in the wrapper.)
    ex = lax.dot_general(e_soft, x, (((1,), (1,)), ((), ())),
                         preferred_element_type=jnp.float32)         # [S, S]
    z = jnp.dot(ex, enc_vt, preferred_element_type=jnp.float32)      # [S, M] == [S, D]

    o_ref[...] = z.astype(o_ref.dtype)                               # lane-dense store


def encoder_decoder_attention_head(x_vectors, enc_output, wq, bq, qk_size):
    """Batched EncoderDecoderAttentionHead forward.

    Args:
      x_vectors:  [H, S, x_size]      decoder token vectors, per head instance
      enc_output: [H, 2, M, S]        encoder output (module's native layout), per head
      wq:         [H, qk_size, x_size] nn.Linear weight, per head
      bq:         [H, qk_size]         nn.Linear bias, per head
      qk_size:    int (must equal x_size; module math also requires M == x_size)
    Returns:
      z: [H, S, x_size]
    """
    H, S, D = x_vectors.shape
    _, two, M, S2 = enc_output.shape
    assert two == 2 and S2 == S
    assert qk_size == D and M == D, "module forward requires qk_size == x_size == M"

    # --- one-time weight / layout prep (constant folding + lane-dense plumbing) ---
    inv_sqrt = 1.0 / jnp.sqrt(jnp.float32(qk_size))
    wq_t = jnp.swapaxes(wq, -1, -2) * inv_sqrt            # [H, D, QK], scale folded in
    bq_s = (bq * inv_sqrt).reshape(H, 1, qk_size)         # [H, 1, QK]
    enc_t = jnp.swapaxes(enc_output, -1, -2)              # [H, 2, S, M]  (lane-dense)

    grid_spec = pltpu.PrefetchScalarGridSpec(
        num_scalar_prefetch=0,
        grid=(H,),
        in_specs=[
            pl.BlockSpec((None, S, D), lambda h: (h, 0, 0)),          # x
            pl.BlockSpec((None, 2, S, M), lambda h: (h, 0, 0, 0)),    # enc (single ref)
            pl.BlockSpec((None, D, qk_size), lambda h: (h, 0, 0)),    # Wq^T (scaled)
            pl.BlockSpec((None, 1, qk_size), lambda h: (h, 0, 0)),    # bias (scaled)
        ],
        out_specs=pl.BlockSpec((None, S, D), lambda h: (h, 0, 0)),
    )

    return pl.pallas_call(
        _attn_head_kernel,
        out_shape=jax.ShapeDtypeStruct((H, S, D), x_vectors.dtype),
        grid_spec=grid_spec,
        compiler_params=pltpu.CompilerParams(
            # Head axis is independent -> "parallel" (megacore split on v7x).
            # Per-step VMEM is ~90 KiB double-buffered, far under every chip's limit.
            dimension_semantics=("parallel",),
        ),
    )(x_vectors, enc_t, wq_t, bq_s)


def _reference(x_vectors, enc_output, wq, bq, qk_size):
    """Straightforward per-head math matching the PyTorch module exactly."""
    q = jnp.einsum("hsd,hqd->hsq", x_vectors, wq) + bq[:, None, :]        # [H, S, QK]
    k = jnp.einsum("hms,hsd->hmd", enc_output[:, 0], x_vectors)           # [H, M, D]
    v = jnp.einsum("hms,hsd->hmd", enc_output[:, 1], x_vectors)           # [H, M, D]
    e = jnp.einsum("hsq,hmq->hsm", q, k) / jnp.sqrt(jnp.float32(qk_size)) # [H, S, M]
    e = jax.nn.softmax(e, axis=-1)       # torch softmax(dim=1) on the 2-D e matrix
    z = jnp.einsum("hsm,hkm->hsk", e, v)  # z = e @ v^T (module semantics; M == D)
    return z


if __name__ == "__main__":
    # Small but lane-dense shapes consistent with the module's math constraints.
    H = 4            # independent head instances batched into one pallas_call
    S = 8            # decoder sequence length (sublane axis)
    D = 128          # x_size == qk_size == M (square attention), full 128-lane width
    QK_SIZE = D
    M = D

    key = jax.random.PRNGKey(0)
    kx, ke, kw, kb = jax.random.split(key, 4)

    x_vectors = jax.random.normal(kx, (H, S, D), dtype=jnp.float32)
    enc_output = jax.random.normal(ke, (H, 2, M, S), dtype=jnp.float32)

    # Deterministic per-head nn.Linear(x_size, qk_size) init (uniform +/- 1/sqrt(x_size)).
    bound = 1.0 / jnp.sqrt(jnp.float32(D))
    wq = jax.random.uniform(kw, (H, QK_SIZE, D), jnp.float32, -bound, bound)
    bq = jax.random.uniform(kb, (H, QK_SIZE), jnp.float32, -bound, bound)

    z = encoder_decoder_attention_head(x_vectors, enc_output, wq, bq, QK_SIZE)
    z = jax.block_until_ready(z)

    z_ref = _reference(x_vectors, enc_output, wq, bq, QK_SIZE)
    assert z.shape == (H, S, D)
    assert jnp.allclose(z, z_ref, atol=1e-4, rtol=1e-4), "mismatch vs reference"

    print("KERNEL_OK")
</pallas_src>

<mosaic_0001>
module attributes {stable_mosaic.version = 11 : i64} {
  func.func @_attn_head_kernel(%arg0: i32, %arg1: memref<1x8x128xf32, #tpu.memory_space<vmem>>, %arg2: memref<1x2x8x128xf32, #tpu.memory_space<vmem>>, %arg3: memref<1x128x128xf32, #tpu.memory_space<vmem>>, %arg4: memref<1x1x128xf32, #tpu.memory_space<vmem>>, %arg5: memref<1x8x128xf32, #tpu.memory_space<vmem>>) attributes {dimension_semantics = [#tpu.dimension_semantics<parallel>], iteration_bounds = array<i64: 4>, scalar_prefetch = 0 : i64, scratch_operands = 0 : i64, tpu.core_type = #tpu.core_type<tc>, window_params = [{transform_indices = @transform_0, window_bounds = array<i64: 1, 8, 128>}, {transform_indices = @transform_1, window_bounds = array<i64: 1, 2, 8, 128>}, {transform_indices = @transform_2, window_bounds = array<i64: 1, 128, 128>}, {transform_indices = @transform_3, window_bounds = array<i64: 1, 1, 128>}, {transform_indices = @transform_4, window_bounds = array<i64: 1, 8, 128>}]} {
    %c0 = arith.constant 0 : index
    %c0_0 = arith.constant 0 : index
    %c0_1 = arith.constant 0 : index
    %0 = vector.load %arg1[%c0, %c0_0, %c0_1] : memref<1x8x128xf32, #tpu.memory_space<vmem>>, vector<1x8x128xf32>
    %1 = vector.shape_cast %0 : vector<1x8x128xf32> to vector<8x128xf32>
    %c0_2 = arith.constant 0 : index
    %c0_3 = arith.constant 0 : index
    %c0_4 = arith.constant 0 : index
    %c0_5 = arith.constant 0 : index
    %2 = vector.load %arg2[%c0_2, %c0_3, %c0_4, %c0_5] : memref<1x2x8x128xf32, #tpu.memory_space<vmem>>, vector<1x1x8x128xf32>
    %3 = vector.shape_cast %2 : vector<1x1x8x128xf32> to vector<8x128xf32>
    %c0_6 = arith.constant 0 : index
    %c1 = arith.constant 1 : index
    %c0_7 = arith.constant 0 : index
    %c0_8 = arith.constant 0 : index
    %4 = vector.load %arg2[%c0_6, %c1, %c0_7, %c0_8] : memref<1x2x8x128xf32, #tpu.memory_space<vmem>>, vector<1x1x8x128xf32>
    %5 = vector.shape_cast %4 : vector<1x1x8x128xf32> to vector<8x128xf32>
    %c0_9 = arith.constant 0 : index
    %c0_10 = arith.constant 0 : index
    %c0_11 = arith.constant 0 : index
    %6 = vector.load %arg3[%c0_9, %c0_10, %c0_11] : memref<1x128x128xf32, #tpu.memory_space<vmem>>, vector<1x128x128xf32>
    %7 = vector.shape_cast %6 : vector<1x128x128xf32> to vector<128x128xf32>
    %cst = arith.constant dense<0.000000e+00> : vector<8x128xf32>
    %8 = tpu.matmul %1, %7, %cst {dimension_numbers = #tpu.dot_dimension_numbers<[1], [0], [0], [1], [0, 0, 1, 1], [], []>} : vector<8x128xf32>, vector<128x128xf32>, vector<8x128xf32> -> vector<8x128xf32>
    %c0_12 = arith.constant 0 : index
    %c0_13 = arith.constant 0 : index
    %c0_14 = arith.constant 0 : index
    %9 = vector.load %arg4[%c0_12, %c0_13, %c0_14] : memref<1x1x128xf32, #tpu.memory_space<vmem>>, vector<1x1x128xf32>
    %10 = vector.shape_cast %9 : vector<1x1x128xf32> to vector<1x128xf32>
    %11 = vector.broadcast %10 : vector<1x128xf32> to vector<8x128xf32>
    %12 = arith.addf %8, %11 : vector<8x128xf32>
    %cst_15 = arith.constant dense<0.000000e+00> : vector<8x8xf32>
    %13 = tpu.matmul %12, %1, %cst_15 {dimension_numbers = #tpu.dot_dimension_numbers<[1], [1], [0], [0], [0, 0, 1, 0], [], []>} : vector<8x128xf32>, vector<8x128xf32>, vector<8x8xf32> -> vector<8x8xf32>
    %cst_16 = arith.constant dense<0.000000e+00> : vector<8x128xf32>
    %14 = tpu.matmul %13, %3, %cst_16 {dimension_numbers = #tpu.dot_dimension_numbers<[1], [0], [0], [1], [0, 0, 1, 1], [], []>} : vector<8x8xf32>, vector<8x128xf32>, vector<8x128xf32> -> vector<8x128xf32>
    %cst_17 = arith.constant dense<0xFF800000> : vector<8xf32>
    %15 = vector.multi_reduction <maximumf>, %14, %cst_17 [1] : vector<8x128xf32> to vector<8xf32>
    %16 = vector.shape_cast %15 : vector<8xf32> to vector<8x1xf32>
    %17 = vector.broadcast %16 : vector<8x1xf32> to vector<8x128xf32>
    %18 = arith.subf %14, %17 : vector<8x128xf32>
    %19 = math.exp %18 : vector<8x128xf32>
    %cst_18 = arith.constant dense<0.000000e+00> : vector<8xf32>
    %20 = vector.multi_reduction <add>, %19, %cst_18 [1] : vector<8x128xf32> to vector<8xf32>
    %21 = vector.shape_cast %20 : vector<8xf32> to vector<8x1xf32>
    %22 = tpu.reciprocal %21 : vector<8x1xf32> -> vector<8x1xf32>
    %23 = vector.broadcast %22 : vector<8x1xf32> to vector<8x128xf32>
    %24 = arith.mulf %19, %23 : vector<8x128xf32>
    %cst_19 = arith.constant dense<0.000000e+00> : vector<8x8xf32>
    %25 = tpu.matmul %24, %1, %cst_19 {dimension_numbers = #tpu.dot_dimension_numbers<[1], [1], [0], [0], [0, 0, 1, 0], [], []>} : vector<8x128xf32>, vector<8x128xf32>, vector<8x8xf32> -> vector<8x8xf32>
    %cst_20 = arith.constant dense<0.000000e+00> : vector<8x128xf32>
    %26 = tpu.matmul %25, %5, %cst_20 {dimension_numbers = #tpu.dot_dimension_numbers<[1], [0], [0], [1], [0, 0, 1, 1], [], []>} : vector<8x8xf32>, vector<8x128xf32>, vector<8x128xf32> -> vector<8x128xf32>
    %c0_21 = arith.constant 0 : index
    %c0_22 = arith.constant 0 : index
    %c0_23 = arith.constant 0 : index
    %27 = vector.load %arg5[%c0_21, %c0_22, %c0_23] : memref<1x8x128xf32, #tpu.memory_space<vmem>>, vector<1x8x128xf32>
    %28 = vector.shape_cast %27 : vector<1x8x128xf32> to vector<8x128xf32>
    %29 = vector.shape_cast %26 : vector<8x128xf32> to vector<1x8x128xf32>
    tpu.vector_store %arg5[%c0_21, %c0_22, %c0_23], %29 {strides = array<i32>} : memref<1x8x128xf32, #tpu.memory_space<vmem>>, vector<1x8x128xf32>,
    return
  }
  func.func @transform_0(%arg0: i32) -> (i32, i32, i32) {
    %c0_i32 = arith.constant 0 : i32
    %c0_i32_0 = arith.constant 0 : i32
    %c0_i32_1 = arith.constant 0 : i32
    return %arg0, %c0_i32, %c0_i32_0 : i32, i32, i32
  }
  func.func @transform_1(%arg0: i32) -> (i32, i32, i32, i32) {
    %c0_i32 = arith.constant 0 : i32
    %c0_i32_0 = arith.constant 0 : i32
    %c0_i32_1 = arith.constant 0 : i32
    %c0_i32_2 = arith.constant 0 : i32
    return %arg0, %c0_i32, %c0_i32_0, %c0_i32_1 : i32, i32, i32, i32
  }
  func.func @transform_2(%arg0: i32) -> (i32, i32, i32) {
    %c0_i32 = arith.constant 0 : i32
    %c0_i32_0 = arith.constant 0 : i32
    %c0_i32_1 = arith.constant 0 : i32
    return %arg0, %c0_i32, %c0_i32_0 : i32, i32, i32
  }
  func.func @transform_3(%arg0: i32) -> (i32, i32, i32) {
    %c0_i32 = arith.constant 0 : i32
    %c0_i32_0 = arith.constant 0 : i32
    %c0_i32_1 = arith.constant 0 : i32
    return %arg0, %c0_i32, %c0_i32_0 : i32, i32, i32
  }
  func.func @transform_4(%arg0: i32) -> (i32, i32, i32) {
    %c0_i32 = arith.constant 0 : i32
    %c0_i32_0 = arith.constant 0 : i32
    %c0_i32_1 = arith.constant 0 : i32
    return %arg0, %c0_i32, %c0_i32_0 : i32, i32, i32
  }
}

</mosaic_0001>

<llo_original>
// kernel: tpu_custom_call.1
$region0: #{tpu_custom_call.1}
  #allocation0 [shape = 'u32[]', space=smem, size = 0x4, offset = 0x4, fixed_abs, tag = 'smem constant byte address 0x4 - core index']
  #allocation1 [shape = 'u32[72,128]{1,0:T(1,128)}', space=vmem, size = 0x9000, scoped, tag = 'internal scratch']
  %s0 = inlined_call_operand.hbm [shape: f32[4,8,128], index: 0, kind: input, shape index: {}]
  %s1 = inlined_call_operand.hbm [shape: f32[4,2,8,128], index: 1, kind: input, shape index: {}]
  %s2 = inlined_call_operand.hbm [shape: f32[4,128,128], index: 2, kind: input, shape index: {}]
  %s3 = inlined_call_operand.hbm [shape: f32[4,1,128], index: 3, kind: input, shape index: {}]
  %s4 = inlined_call_operand.hbm [shape: f32[4,8,128], index: 4, kind: output, shape index: {}]
  %s5 = sld [smem:[#allocation0]]
  $region65: #{tpu_custom_call.1} parent=0
    _
  %s7 = ssub.s32 1, %s5
  %s8 = scalar_select 0, %s7, %s5
  $region1: #{tpu_custom_call.1} parent=0
    #allocation2 [shape = 'u8[8192]{0}', space=vmem, size = 0x2000, scoped, tag = 'input window, operand 0']
    #allocation3 [shape = 's32[2]{0}', space=sflag, size = 0x8, scoped, tag = 'scoped memory for tpu_custom_call.1']
    #allocation4 [shape = 's32[2]{0}', space=sflag, size = 0x8, scoped, tag = 'scoped memory for tpu_custom_call.1']
    #allocation5 [shape = 'u8[16384]{0}', space=vmem, size = 0x4000, scoped, tag = 'input window, operand 1']
    #allocation6 [shape = 's32[2]{0}', space=sflag, size = 0x8, scoped, tag = 'scoped memory for tpu_custom_call.1']
    #allocation7 [shape = 'u8[131072]{0}', space=vmem, size = 0x20000, scoped, tag = 'input window, operand 2']
    #allocation8 [shape = 'u8[1024]{0}', space=vmem, size = 0x400, scoped, tag = 'input window, operand 3']
    #allocation9 [shape = 's32[2]{0}', space=sflag, size = 0x8, scoped, tag = 'scoped memory for tpu_custom_call.1']
    #allocation10 [shape = 'u8[8192]{0}', space=vmem, size = 0x2000, scoped, tag = 'output window, operand 0']
    %9 = vsyncpa [#allocation3], 0
    %s10 = scalar_lea.sflag [#allocation3], 1
    %11 = vsyncpa %s10, 0
    %12 = vsyncpa [#allocation6], 0
    %s13 = scalar_lea.sflag [#allocation6], 1
    %14 = vsyncpa %s13, 0
    %15 = vsyncpa [#allocation9], 0
    %s16 = scalar_lea.sflag [#allocation9], 1
    %17 = vsyncpa %s16, 0
    %18 = vsyncpa [#allocation4], 0
    %s19 = scalar_lea.sflag [#allocation4], 1
    %20 = vsyncpa %s19, 0
    loop: start=0, step=1, limit=6
    $region2: #{tpu_custom_call.1} parent=1 // loop_pre_header
      _
    $region3: #{tpu_custom_call.1} parent=1 // loop_header
      %s22 = sphi 0, %s26
      %p23 = scmp.ge.s32.totalorder %s22, 6
      %s32 = sphi 0, %s34
      %s35 = sphi 0, %s32
      %s36 = sphi 0, %s35
      %s52 = sphi 0, %s36
      %s58 = sphi 0, %s60
      %s61 = sphi 0, %s58
      %s62 = sphi 0, %s61
      %s78 = sphi 0, %s62
      %s84 = sphi 0, %s86
      %s87 = sphi 0, %s84
      %s88 = sphi 0, %s87
      %s104 = sphi 0, %s88
      %s110 = sphi 0, %s112
      %s113 = sphi 0, %s110
      %s114 = sphi 0, %s113
      %s130 = sphi 0, %s114
      %s136 = sphi 0, %s138
      %s139 = sphi 0, %s136
      %s140 = sphi 0, %s139
      %s156 = sphi 0, %s140
    $region4: #{tpu_custom_call.1} parent=1 // loop_header_branch
      %25 = sbr.rel (%p23) target = $region8
    $region5: #{tpu_custom_call.1} parent=1 // loop_body
      %s27 = ssub.s32 %s22, 1
      %s28 = ssub.s32 %s22, 2
      %s29 = sadd.s32 %s22, 1
      %s30 = ssub.s32 %s22, %s29
      %p31 = scmp.eq.s32.totalorder %s30, 0
      %s33 = sadd.s32 %s32, 1
      %s34 = scalar_select %p31, %s32, %s33
      %p37 = pneg %p31
      %p38 = scmp.eq.s32.totalorder %s22, 3
      %p39 = por %p37, %p38
      %p40 = scmp.ne.s32.totalorder %s32, %s35
      %p41 = scmp.eq.s32.totalorder %s22, 0
      %p42 = por %p40, %p41
      %p43 = scmp.ne.s32.totalorder %s32, %s35
      %p44 = scmp.eq.s32.totalorder %s27, 3
      %p45 = por %p43, %p44
      %p46 = scmp.ne.s32.totalorder %s35, %s36
      %p47 = scmp.eq.s32.totalorder %s27, 0
      %p48 = por %p46, %p47
      %p49 = scmp.ne.s32.totalorder %s35, %s36
      %p50 = scmp.eq.s32.totalorder %s28, 3
      %p51 = por %p49, %p50
      %p53 = scmp.ne.s32.totalorder %s36, %s52
      %p54 = scmp.eq.s32.totalorder %s28, 0
      %p55 = por %p53, %p54
      %s56 = ssub.s32 %s22, %s29
      %p57 = scmp.eq.s32.totalorder %s56, 0
      %s59 = sadd.s32 %s58, 1
      %s60 = scalar_select %p57, %s58, %s59
      %p63 = pneg %p57
      %p64 = scmp.eq.s32.totalorder %s22, 3
      %p65 = por %p63, %p64
      %p66 = scmp.ne.s32.totalorder %s58, %s61
      %p67 = scmp.eq.s32.totalorder %s22, 0
      %p68 = por %p66, %p67
      %p69 = scmp.ne.s32.totalorder %s58, %s61
      %p70 = scmp.eq.s32.totalorder %s27, 3
      %p71 = por %p69, %p70
      %p72 = scmp.ne.s32.totalorder %s61, %s62
      %p73 = scmp.eq.s32.totalorder %s27, 0
      %p74 = por %p72, %p73
      %p75 = scmp.ne.s32.totalorder %s61, %s62
      %p76 = scmp.eq.s32.totalorder %s28, 3
      %p77 = por %p75, %p76
      %p79 = scmp.ne.s32.totalorder %s62, %s78
      %p80 = scmp.eq.s32.totalorder %s28, 0
      %p81 = por %p79, %p80
      %s82 = ssub.s32 %s22, %s29
      %p83 = scmp.eq.s32.totalorder %s82, 0
      %s85 = sadd.s32 %s84, 1
      %s86 = scalar_select %p83, %s84, %s85
      %p89 = pneg %p83
      %p90 = scmp.eq.s32.totalorder %s22, 3
      %p91 = por %p89, %p90
      %p92 = scmp.ne.s32.totalorder %s84, %s87
      %p93 = scmp.eq.s32.totalorder %s22, 0
      %p94 = por %p92, %p93
      %p95 = scmp.ne.s32.totalorder %s84, %s87
      %p96 = scmp.eq.s32.totalorder %s27, 3
      %p97 = por %p95, %p96
      %p98 = scmp.ne.s32.totalorder %s87, %s88
      %p99 = scmp.eq.s32.totalorder %s27, 0
      %p100 = por %p98, %p99
      %p101 = scmp.ne.s32.totalorder %s87, %s88
      %p102 = scmp.eq.s32.totalorder %s28, 3
      %p103 = por %p101, %p102
      %p105 = scmp.ne.s32.totalorder %s88, %s104
      %p106 = scmp.eq.s32.totalorder %s28, 0
      %p107 = por %p105, %p106
      %s108 = ssub.s32 %s22, %s29
      %p109 = scmp.eq.s32.totalorder %s108, 0
      %s111 = sadd.s32 %s110, 1
      %s112 = scalar_select %p109, %s110, %s111
      %p115 = pneg %p109
      %p116 = scmp.eq.s32.totalorder %s22, 3
      %p117 = por %p115, %p116
      %p118 = scmp.ne.s32.totalorder %s110, %s113
      %p119 = scmp.eq.s32.totalorder %s22, 0
      %p120 = por %p118, %p119
      %p121 = scmp.ne.s32.totalorder %s110, %s113
      %p122 = scmp.eq.s32.totalorder %s27, 3
      %p123 = por %p121, %p122
      %p124 = scmp.ne.s32.totalorder %s113, %s114
      %p125 = scmp.eq.s32.totalorder %s27, 0
      %p126 = por %p124, %p125
      %p127 = scmp.ne.s32.totalorder %s113, %s114
      %p128 = scmp.eq.s32.totalorder %s28, 3
      %p129 = por %p127, %p128
      %p131 = scmp.ne.s32.totalorder %s114, %s130
      %p132 = scmp.eq.s32.totalorder %s28, 0
      %p133 = por %p131, %p132
      %s134 = ssub.s32 %s22, %s29
      %p135 = scmp.eq.s32.totalorder %s134, 0
      %s137 = sadd.s32 %s136, 1
      %s138 = scalar_select %p135, %s136, %s137
      %p141 = pneg %p135
      %p142 = scmp.eq.s32.totalorder %s22, 3
      %p143 = por %p141, %p142
      %p144 = scmp.ne.s32.totalorder %s136, %s139
      %p145 = scmp.eq.s32.totalorder %s22, 0
      %p146 = por %p144, %p145
      %p147 = scmp.ne.s32.totalorder %s136, %s139
      %p148 = scmp.eq.s32.totalorder %s27, 3
      %p149 = por %p147, %p148
      %p150 = scmp.ne.s32.totalorder %s139, %s140
      %p151 = scmp.eq.s32.totalorder %s27, 0
      %p152 = por %p150, %p151
      %p153 = scmp.ne.s32.totalorder %s139, %s140
      %p154 = scmp.eq.s32.totalorder %s28, 3
      %p155 = por %p153, %p154
      %p157 = scmp.ne.s32.totalorder %s140, %s156
      %p158 = scmp.eq.s32.totalorder %s28, 0
      %p159 = por %p157, %p158
      %p160 = scmp.le.s32.totalorder 1, %s22
      %p161 = scmp.lt.s32.totalorder %s22, 5
      %p162 = pnand %p160, %p161
      %p163 = pneg %p162
      // Predicated region
      $region9: #{tpu_custom_call.1} parent=5 // pred_check
        _
      $region10: #{tpu_custom_call.1} parent=5 // pred_check_branch
        %165 = sbr.rel (%p162) target = $region12
      $region11: #{tpu_custom_call.1} parent=5 // pred_region
        %s166 = ssub.s32 %s22, 1
      $region12: #{tpu_custom_call.1} parent=5 // pred_fallthru
        _
      %p167 = scmp.lt.s32.totalorder %s22, 4
      // Predicated region
      $region13: #{tpu_custom_call.1} parent=5 // pred_check
        %p168 = pneg %p167
      $region14: #{tpu_custom_call.1} parent=5 // pred_check_branch
        %170 = sbr.rel (%p168) target = $region16
      $region15: #{tpu_custom_call.1} parent=5 // pred_region
        // Predicated region
        $region17: #{tpu_custom_call.1} parent=15 // pred_check
          %p171 = pneg %p42
        $region18: #{tpu_custom_call.1} parent=15 // pred_check_branch
          %173 = sbr.rel (%p171) target = $region20
        $region19: #{tpu_custom_call.1} parent=15 // pred_region
          %s174 = sand.u32 %s32, 1
          %s175 = scalar_lea.sflag [#allocation3], %s174
          %s176 = sand.u32 %s32, 1
          %s177 = smul.addr %s176, 8
          %s178 = scalar_lea.vmem [#allocation2], %s177
          %180 = vsyncadd %s175, 0
          %s181 = smul.addr %s22, 8
          %s182 = scalar_lea.hbm %s0, %s181
          %s184 = sshll.u32 %s182, 4
          %s185 = int_to_ptr.hbm [resolvable:$true] %s184
          %s186 = sshll.u32 %s178, 4
          %s187 = int_to_ptr.vmem [resolvable:$true] %s186
          %189 = dma.hbm_to_vmem [thread:$0]  %s185, 128, %s187, %s175
        $region20: #{tpu_custom_call.1} parent=15 // pred_fallthru
          _
        // Predicated region
        $region21: #{tpu_custom_call.1} parent=15 // pred_check
          %p190 = pneg %p68
        $region22: #{tpu_custom_call.1} parent=15 // pred_check_branch
          %192 = sbr.rel (%p190) target = $region24
        $region23: #{tpu_custom_call.1} parent=15 // pred_region
          %s193 = sand.u32 %s22, 1
          %s194 = scalar_lea.sflag [#allocation6], %s193
          %s195 = sand.u32 %s58, 1
          %s196 = smul.addr %s195, 16
          %s197 = scalar_lea.vmem [#allocation5], %s196
          %199 = vsyncadd %s194, 0
          %s200 = smul.addr %s22, 2
          %s201 = smul.addr %s200, 8
          %s202 = scalar_lea.hbm %s1, %s201
          %s203 = sshll.u32 %s202, 4
          %s204 = int_to_ptr.hbm [resolvable:$true] %s203
          %s205 = sshll.u32 %s197, 4
          %s206 = int_to_ptr.vmem [resolvable:$true] %s205
          %211 = dma.hbm_to_vmem [thread:$0]  %s204, 256, %s206, %s194, 128, 128, 8
        $region24: #{tpu_custom_call.1} parent=15 // pred_fallthru
          _
        // Predicated region
        $region25: #{tpu_custom_call.1} parent=15 // pred_check
          %p212 = pneg %p94
        $region26: #{tpu_custom_call.1} parent=15 // pred_check_branch
          %214 = sbr.rel (%p212) target = $region28
        $region27: #{tpu_custom_call.1} parent=15 // pred_region
          %s215 = sand.u32 %s22, 1
          %s216 = scalar_lea.sflag [#allocation6], %s215
          %s217 = sand.u32 %s84, 1
          %s218 = smul.addr %s217, 128
          %s219 = scalar_lea.vmem [#allocation7], %s218
          %221 = vsyncadd %s216, 0
          %s222 = smul.addr %s22, 16
          %s223 = smul.addr %s222, 8
          %s224 = scalar_lea.hbm %s2, %s223
          %s225 = sshll.u32 %s224, 4
          %s226 = int_to_ptr.hbm [resolvable:$true] %s225
          %s227 = sshll.u32 %s219, 4
          %s228 = int_to_ptr.vmem [resolvable:$true] %s227
          %233 = dma.hbm_to_vmem [thread:$0]  %s226, 2048, %s228, %s216, 128, 128, 8
        $region28: #{tpu_custom_call.1} parent=15 // pred_fallthru
          _
        // Predicated region
        $region29: #{tpu_custom_call.1} parent=15 // pred_check
          %p234 = pneg %p120
        $region30: #{tpu_custom_call.1} parent=15 // pred_check_branch
          %236 = sbr.rel (%p234) target = $region32
        $region31: #{tpu_custom_call.1} parent=15 // pred_region
          %s237 = sand.u32 %s110, 1
          %s238 = scalar_lea.sflag [#allocation9], %s237
          %s239 = sand.u32 %s110, 1
          %s240 = scalar_lea.vmem [#allocation8], %s239
          %242 = vsyncadd %s238, 0
          %s243 = scalar_lea.hbm %s3, %s22
          %s245 = sshll.u32 %s243, 4
          %s246 = int_to_ptr.hbm [resolvable:$true] %s245
          %s247 = sshll.u32 %s240, 4
          %s248 = int_to_ptr.vmem [resolvable:$true] %s247
          %250 = dma.hbm_to_vmem [thread:$0]  %s246, 16, %s248, %s238
        $region32: #{tpu_custom_call.1} parent=15 // pred_fallthru
          _
      $region16: #{tpu_custom_call.1} parent=5 // pred_fallthru
        _
      %p251 = scmp.le.s32.totalorder 1, %s22
      %p252 = scmp.lt.s32.totalorder %s22, 5
      %p253 = pnand %p251, %p252
      %p254 = pneg %p253
      // Predicated region
      $region33: #{tpu_custom_call.1} parent=5 // pred_check
        _
      $region34: #{tpu_custom_call.1} parent=5 // pred_check_branch
        %256 = sbr.rel (%p253) target = $region36
      $region35: #{tpu_custom_call.1} parent=5 // pred_region
        %s257 = ssub.s32 %s22, 1
        %s258 = sand.u32 %s35, 1
        %s259 = scalar_lea.sflag [#allocation3], %s258
        %s260 = sand.u32 %s35, 1
        %s261 = smul.addr %s260, 8
        %s262 = scalar_lea.vmem [#allocation2], %s261
        // Predicated region
        $region37: #{tpu_custom_call.1} parent=35 // pred_check
          %p263 = pneg %p48
        $region38: #{tpu_custom_call.1} parent=35 // pred_check_branch
          %265 = sbr.rel (%p263) target = $region40
        $region39: #{tpu_custom_call.1} parent=35 // pred_region
          %267 = dma.done %s259, 128
        $region40: #{tpu_custom_call.1} parent=35 // pred_fallthru
          _
        %s268 = sand.u32 %s27, 1
        %s269 = scalar_lea.sflag [#allocation6], %s268
        %s270 = sand.u32 %s61, 1
        %s271 = smul.addr %s270, 16
        %s272 = scalar_lea.vmem [#allocation5], %s271
        // Predicated region
        $region41: #{tpu_custom_call.1} parent=35 // pred_check
          %p273 = pneg %p74
        $region42: #{tpu_custom_call.1} parent=35 // pred_check_branch
          %275 = sbr.rel (%p273) target = $region44
        $region43: #{tpu_custom_call.1} parent=35 // pred_region
          %277 = dma.done %s269, 256
        $region44: #{tpu_custom_call.1} parent=35 // pred_fallthru
          _
        %s278 = sand.u32 %s27, 1
        %s279 = scalar_lea.sflag [#allocation6], %s278
        %s280 = sand.u32 %s87, 1
        %s281 = smul.addr %s280, 128
        %s282 = scalar_lea.vmem [#allocation7], %s281
        // Predicated region
        $region45: #{tpu_custom_call.1} parent=35 // pred_check
          %p283 = pneg %p100
        $region46: #{tpu_custom_call.1} parent=35 // pred_check_branch
          %285 = sbr.rel (%p283) target = $region48
        $region47: #{tpu_custom_call.1} parent=35 // pred_region
          %287 = dma.done %s279, 2048
        $region48: #{tpu_custom_call.1} parent=35 // pred_fallthru
          _
        %s288 = sand.u32 %s113, 1
        %s289 = scalar_lea.sflag [#allocation9], %s288
        %s290 = sand.u32 %s113, 1
        %s291 = scalar_lea.vmem [#allocation8], %s290
        // Predicated region
        $region49: #{tpu_custom_call.1} parent=35 // pred_check
          %p292 = pneg %p126
        $region50: #{tpu_custom_call.1} parent=35 // pred_check_branch
          %294 = sbr.rel (%p292) target = $region52
        $region51: #{tpu_custom_call.1} parent=35 // pred_region
          %296 = dma.done %s289, 16
        $region52: #{tpu_custom_call.1} parent=35 // pred_fallthru
          _
        %s297 = sand.u32 %s35, 1
        %s298 = scalar_lea.sflag [#allocation3], %s297
        %s299 = sand.u32 %s35, 1
        %s300 = smul.addr %s299, 8
        %s301 = scalar_lea.vmem [#allocation2], %s300
        %p302 = pneg %p48
        %p303 = pneg %p45
        %s304 = sand.u32 %s27, 1
        %s305 = scalar_lea.sflag [#allocation6], %s304
        %s306 = sand.u32 %s61, 1
        %s307 = smul.addr %s306, 16
        %s308 = scalar_lea.vmem [#allocation5], %s307
        %p309 = pneg %p74
        %p310 = pneg %p71
        %s311 = sand.u32 %s27, 1
        %s312 = scalar_lea.sflag [#allocation6], %s311
        %s313 = sand.u32 %s87, 1
        %s314 = smul.addr %s313, 128
        %s315 = scalar_lea.vmem [#allocation7], %s314
        %p316 = pneg %p100
        %p317 = pneg %p97
        %s318 = sand.u32 %s113, 1
        %s319 = scalar_lea.sflag [#allocation9], %s318
        %s320 = sand.u32 %s113, 1
        %s321 = scalar_lea.vmem [#allocation8], %s320
        %p322 = pneg %p126
        %p323 = pneg %p123
        %p324 = pneg %p152
        %p325 = pneg %p149
        %s326 = sand.u32 %s139, 1
        %s327 = scalar_lea.sflag [#allocation4], %s326
        %s328 = sand.u32 %s139, 1
        %s329 = smul.addr %s328, 8
        %s330 = scalar_lea.vmem [#allocation10], %s329
        %v331 = vld [vmem:[%s262] sm:$0xff]
        %v332 = vld [vmem:[%s272] sm:$0xff]
        %s333 = scalar_lea.vmem %s272, 8 [#allocation5]
        %v334 = vld [vmem:[%s333] sm:$0xff]
        %v335 = vld [vmem:[%s282] sm:$0xff]
        %v336 = vld [vmem:[%s282 + $0x8] sm:$0xff]
        %v337 = vld [vmem:[%s282 + $0x10] sm:$0xff]
        %v338 = vld [vmem:[%s282 + $0x18] sm:$0xff]
        %v339 = vld [vmem:[%s282 + $0x20] sm:$0xff]
        %v340 = vld [vmem:[%s282 + $0x28] sm:$0xff]
        %v341 = vld [vmem:[%s282 + $0x30] sm:$0xff]
        %v342 = vld [vmem:[%s282 + $0x38] sm:$0xff]
        %v343 = vld [vmem:[%s282 + $0x40] sm:$0xff]
        %v344 = vld [vmem:[%s282 + $0x48] sm:$0xff]
        %v345 = vld [vmem:[%s282 + $0x50] sm:$0xff]
        %v346 = vld [vmem:[%s282 + $0x58] sm:$0xff]
        %v347 = vld [vmem:[%s282 + $0x60] sm:$0xff]
        %v348 = vld [vmem:[%s282 + $0x68] sm:$0xff]
        %v349 = vld [vmem:[%s282 + $0x70] sm:$0xff]
        %v350 = vld [vmem:[%s282 + $0x78] sm:$0xff]
        %v351 = vld [vmem:[%s291] sm:$0x1]
        %v353 = vperm.slane %v351, 0
        %355 = vmatpush.msra.mxu0 %v350
        %356 = vmatpush.msra.mxu0 %v349
        %357 = vmatpush.msra.mxu0 %v348
        %358 = vmatpush.msra.mxu0 %v347
        %359 = vmatpush.msra.mxu0 %v346
        %360 = vmatpush.msra.mxu0 %v345
        %361 = vmatpush.msra.mxu0 %v344
        %362 = vmatpush.msra.mxu0 %v343
        %363 = vmatpush.msra.mxu0 %v342
        %364 = vmatpush.msra.mxu0 %v341
        %365 = vmatpush.msra.mxu0 %v340
        %366 = vmatpush.msra.mxu0 %v339
        %367 = vmatpush.msra.mxu0 %v338
        %368 = vmatpush.msra.mxu0 %v337
        %369 = vmatpush.msra.mxu0 %v336
        %370 = vmatpush.msra.mxu0 %v335
        %371 = vmatmul.f32.gmra.mxu0 %v331
        %v372 = vpop.f32.mrf.mxu0
        %v373 = vadd.f32 %v353, %v372
        %374 = vdwg.mxu0
        %375 = vmatpush.xpose.msra.mxu0 0.0
        %376 = vmatpush.xpose.msra.mxu0 0.0
        %377 = vmatpush.xpose.msra.mxu0 0.0
        %378 = vmatpush.xpose.msra.mxu0 0.0
        %379 = vmatpush.xpose.msra.mxu0 0.0
        %380 = vmatpush.xpose.msra.mxu0 0.0
        %381 = vmatpush.xpose.msra.mxu0 0.0
        %382 = vmatpush.xpose.msra.mxu0 0.0
        %383 = vmatpush.xpose.msra.mxu0 0.0
        %384 = vmatpush.xpose.msra.mxu0 0.0
        %385 = vmatpush.xpose.msra.mxu0 0.0
        %386 = vmatpush.xpose.msra.mxu0 0.0
        %387 = vmatpush.xpose.msra.mxu0 0.0
        %388 = vmatpush.xpose.msra.mxu0 0.0
        %389 = vmatpush.xpose.msra.mxu0 0.0
        %390 = vmatpush.xpose.msra.mxu0 %v331
        %391 = vmatmul.f32.gmra.mxu0 %v373
        %v392 = vpop.f32.mrf.mxu0
        %v393 = vadd.f32 0.0, %v392
        %394 = vdwg.mxu0
        %vm395 = vcmask 64512
        %v397 = vsel %vm395, %v393, 0
        %399 = vmatpush.msra.mxu0 0.0
        %400 = vmatpush.msra.mxu0 0.0
        %401 = vmatpush.msra.mxu0 0.0
        %402 = vmatpush.msra.mxu0 0.0
        %403 = vmatpush.msra.mxu0 0.0
        %404 = vmatpush.msra.mxu0 0.0
        %405 = vmatpush.msra.mxu0 0.0
        %406 = vmatpush.msra.mxu0 0.0
        %407 = vmatpush.msra.mxu0 0.0
        %408 = vmatpush.msra.mxu0 0.0
        %409 = vmatpush.msra.mxu0 0.0
        %410 = vmatpush.msra.mxu0 0.0
        %411 = vmatpush.msra.mxu0 0.0
        %412 = vmatpush.msra.mxu0 0.0
        %413 = vmatpush.msra.mxu0 0.0
        %414 = vmatpush.msra.mxu0 %v332
        %415 = vmatmul.f32.gmra.mxu0 %v397
        %v416 = vpop.f32.mrf.mxu0
        %v417 = vadd.f32 0.0, %v416
        %418 = vdwg.mxu0
        %419 = vmax.xlane.f32.xlu0 %v417
        %v420 = vpop.xlane.xlu0 %419
        %v421 = vsub.f32 %v417, %v420
        %v422 = vmul.f32 %v421, 1.442695
        %v423 = vpow.pop %v422
        %424 = vadd.xlane.f32.xlu0 %v423
        %v425 = vpop.xlane.xlu0 %424
        %v426 = vrcp.pop %v425
        %v427 = vmul.f32 %v425, %v426
        %v428 = vsub.f32 1.0, %v427
        %v429 = vmul.f32 %v426, %v428
        %v430 = vadd.f32 %v426, %v429
        %vm431 = vweird.f32 %v425
        %vm432 = vweird.f32 %v426
        %vm433 = vmor %vm431, %vm432
        %v434 = vsel %vm433, %v426, %v430
        %v435 = vand.u32 2147483647, %v425
        %vm436 = vcmp.eq.f32.partialorder %v435, 8.507059e+37
        %v437 = vand.u32 %v425, 2147483648
        %v438 = vor.u32 1.1754944e-38, %v437
        %v439 = vsel %vm436, %v438, %v434
        %v440 = vmul.f32 %v423, %v439
        %441 = vmatpush.xpose.msra.mxu0 0.0
        %442 = vmatpush.xpose.msra.mxu0 0.0
        %443 = vmatpush.xpose.msra.mxu0 0.0
        %444 = vmatpush.xpose.msra.mxu0 0.0
        %445 = vmatpush.xpose.msra.mxu0 0.0
        %446 = vmatpush.xpose.msra.mxu0 0.0
        %447 = vmatpush.xpose.msra.mxu0 0.0
        %448 = vmatpush.xpose.msra.mxu0 0.0
        %449 = vmatpush.xpose.msra.mxu0 0.0
        %450 = vmatpush.xpose.msra.mxu0 0.0
        %451 = vmatpush.xpose.msra.mxu0 0.0
        %452 = vmatpush.xpose.msra.mxu0 0.0
        %453 = vmatpush.xpose.msra.mxu0 0.0
        %454 = vmatpush.xpose.msra.mxu0 0.0
        %455 = vmatpush.xpose.msra.mxu0 0.0
        %456 = vmatpush.xpose.msra.mxu0 %v331
        %457 = vmatmul.f32.gmra.mxu0 %v440
        %v458 = vpop.f32.mrf.mxu0
        %v459 = vadd.f32 0.0, %v458
        %460 = vdwg.mxu0
        %v462 = vsel %vm395, %v459, 0
        %464 = vmatpush.msra.mxu0 0.0
        %465 = vmatpush.msra.mxu0 0.0
        %466 = vmatpush.msra.mxu0 0.0
        %467 = vmatpush.msra.mxu0 0.0
        %468 = vmatpush.msra.mxu0 0.0
        %469 = vmatpush.msra.mxu0 0.0
        %470 = vmatpush.msra.mxu0 0.0
        %471 = vmatpush.msra.mxu0 0.0
        %472 = vmatpush.msra.mxu0 0.0
        %473 = vmatpush.msra.mxu0 0.0
        %474 = vmatpush.msra.mxu0 0.0
        %475 = vmatpush.msra.mxu0 0.0
        %476 = vmatpush.msra.mxu0 0.0
        %477 = vmatpush.msra.mxu0 0.0
        %478 = vmatpush.msra.mxu0 0.0
        %479 = vmatpush.msra.mxu0 %v334
        %480 = vmatmul.f32.gmra.mxu0 %v462
        %v481 = vpop.f32.mrf.mxu0
        %v482 = vadd.f32 0.0, %v481
        %483 = vdwg.mxu0
        %484 = vst [vmem:[%s330] sm:$0xff] %v482
        %s485 = sand.u32 %s139, 1
        %s486 = scalar_lea.sflag [#allocation4], %s485
        %s487 = sand.u32 %s139, 1
        %s488 = smul.addr %s487, 8
        %s489 = scalar_lea.vmem [#allocation10], %s488
        // Predicated region
        $region53: #{tpu_custom_call.1} parent=35 // pred_check
          %p490 = pneg %p149
        $region54: #{tpu_custom_call.1} parent=35 // pred_check_branch
          %492 = sbr.rel (%p490) target = $region56
        $region55: #{tpu_custom_call.1} parent=35 // pred_region
          %494 = vsyncadd %s486, 0
          %s495 = smul.addr %s27, 8
          %s496 = scalar_lea.hbm %s4, %s495
          %s498 = sshll.u32 %s489, 4
          %s499 = int_to_ptr.vmem [resolvable:$true] %s498
          %s500 = sshll.u32 %s496, 4
          %s501 = int_to_ptr.hbm [resolvable:$true] %s500
          %503 = dma.vmem_to_hbm [thread:$0]  %s499, 128, %s501, %s486
        $region56: #{tpu_custom_call.1} parent=35 // pred_fallthru
          _
      $region36: #{tpu_custom_call.1} parent=5 // pred_fallthru
        _
      %p504 = scmp.le.s32.totalorder 2, %s22
      // Predicated region
      $region57: #{tpu_custom_call.1} parent=5 // pred_check
        %p505 = pneg %p504
      $region58: #{tpu_custom_call.1} parent=5 // pred_check_branch
        %507 = sbr.rel (%p505) target = $region60
      $region59: #{tpu_custom_call.1} parent=5 // pred_region
        %s508 = ssub.s32 %s22, 2
        // Predicated region
        $region61: #{tpu_custom_call.1} parent=59 // pred_check
          %p509 = pneg %p155
        $region62: #{tpu_custom_call.1} parent=59 // pred_check_branch
          %511 = sbr.rel (%p509) target = $region64
        $region63: #{tpu_custom_call.1} parent=59 // pred_region
          %s512 = sand.u32 %s140, 1
          %s513 = scalar_lea.sflag [#allocation4], %s512
          %s514 = sand.u32 %s140, 1
          %s515 = smul.addr %s514, 8
          %s516 = scalar_lea.vmem [#allocation10], %s515
          %518 = dma.done %s513, 128
        $region64: #{tpu_custom_call.1} parent=59 // pred_fallthru
          _
      $region60: #{tpu_custom_call.1} parent=5 // pred_fallthru
        _
    $region6: #{tpu_custom_call.1} parent=1 // loop_footer
      %s26 = sadd.s32 1, %s22
    $region7: #{tpu_custom_call.1} parent=1 // loop_footer_branch
      %21 = sbr.rel target = $region3
    $region8: #{tpu_custom_call.1} parent=1 // loop_exit
      _
    %519 = vsyncpa [#allocation3], 1
    %s520 = scalar_lea.sflag [#allocation3], 1
    %521 = vsyncpa %s520, 1
    %522 = vsyncpa [#allocation6], 1
    %s523 = scalar_lea.sflag [#allocation6], 1
    %524 = vsyncpa %s523, 1
    %525 = vsyncpa [#allocation9], 1
    %s526 = scalar_lea.sflag [#allocation9], 1
    %527 = vsyncpa %s526, 1
    %528 = vsyncpa [#allocation4], 1
    %s529 = scalar_lea.sflag [#allocation4], 1
    %530 = vsyncpa %s529, 1

</llo_original>
